<compile_context>
chip_gen: v7x
topology: tpu7x:2x2x1
jax: 0.10.0
libtpu: 0.0.40
codegen_flags: <defaults>
</compile_context>

<pallas_src>
import jax
import jax.numpy as jnp
from jax.experimental import pallas as pl
from jax.experimental.pallas import tpu as pltpu

EPS = 1e-6


def _round_up(n, m):
    return ((n + m - 1) // m) * m


# ---------------------------------------------------------------------------
# Kernel
# ---------------------------------------------------------------------------
def sublayer_connection_kernel(x_ref, a2_ref, w_ref, bias_ref, out_ref, normed_ref):
    # x_ref:      (TR, HIDDEN)   input row tile (residual source), caller dtype
    # a2_ref:     (1, HIDDEN)    LayerNorm scale, f32
    # w_ref:      (HIDDEN, TN)   sublayer (Linear) weight column block, bf16
    # bias_ref:   (1, TN)        folded bias block (b_2 @ W + bias), f32
    # out_ref:    (TR, TN)       output block
    # normed_ref: (TR, HIDDEN)   bf16 scratch: LayerNorm(x) for this row tile
    j = pl.program_id(1)
    tn = out_ref.shape[-1]

    # ---- LayerNorm once per row tile; reused for every W column block ----
    @pl.when(j == 0)
    def _():
        x = x_ref[...].astype(jnp.float32)
        n = x.shape[-1]
        mean = jnp.mean(x, axis=-1, keepdims=True)
        diff = x - mean                                     # centered (stable) form
        # torch .std(-1) is unbiased -> divide by (N - 1); eps added to std**2.
        var_unbiased = jnp.sum(diff * diff, axis=-1, keepdims=True) * (1.0 / (n - 1))
        inv = jax.lax.rsqrt(var_unbiased + EPS)
        normed_ref[...] = (diff * (inv * a2_ref[...])).astype(normed_ref.dtype)

    # ---- sublayer: Linear column block on the MXU (bf16 in, f32 acc) ----
    y = jnp.dot(normed_ref[...], w_ref[...], preferred_element_type=jnp.float32)
    y = y + bias_ref[...]

    # ---- residual connection (x slice matching this output column block) ----
    if tn == x_ref.shape[-1]:                       # C == 1: full-width block
        x_res = x_ref[...].astype(jnp.float32)
    else:
        col = pl.multiple_of(j * tn, tn)            # tn is a multiple of 128 here
        x_res = x_ref[:, pl.ds(col, tn)].astype(jnp.float32)
    out_ref[...] = (x_res + y).astype(out_ref.dtype)


# ---------------------------------------------------------------------------
# VMEM sizing / tile selection
# ---------------------------------------------------------------------------
def _vmem_capacity_bytes():
    try:
        return int(pltpu.get_tpu_info().vmem_capacity_bytes)
    except Exception:              # hardware query only — never masks kernel errors
        return 64 * 1024 * 1024    # conservative: v7x per-TensorCore VMEM


_BUFFERED_ONE_OK = None


def _buffered_one_supported():
    """One-time probe: does this Pallas build accept pipeline_mode=pl.Buffered(1)?"""
    global _BUFFERED_ONE_OK
    if _BUFFERED_ONE_OK is None:
        def probe_kernel(c_ref, x_ref, o_ref):
            o_ref[...] = x_ref[...] + c_ref[...]
        try:
            out = pl.pallas_call(
                probe_kernel,
                out_shape=jax.ShapeDtypeStruct((8, 128), jnp.float32),
                grid_spec=pltpu.PrefetchScalarGridSpec(
                    num_scalar_prefetch=0,
                    grid=(1,),
                    in_specs=[
                        pl.BlockSpec((8, 128), lambda i: (0, 0),
                                     pipeline_mode=pl.Buffered(1)),
                        pl.BlockSpec((8, 128), lambda i: (i, 0)),
                    ],
                    out_specs=pl.BlockSpec((8, 128), lambda i: (i, 0)),
                ),
            )(jnp.zeros((8, 128), jnp.float32), jnp.ones((8, 128), jnp.float32))
            jax.block_until_ready(out)
            _BUFFERED_ONE_OK = True
        except Exception:
            _BUFFERED_ONE_OK = False
    return _BUFFERED_ONE_OK


def _vmem_estimate(tr, tn, hidden, x_isz, o_isz, w_buffers):
    x_stream = 2 * tr * hidden * x_isz                 # x row tile, double-buffered
    o_stream = 2 * tr * tn * o_isz                     # output block, double-buffered
    w_block = w_buffers * hidden * tn * 2              # bf16 W column block
    consts = 2 * (hidden + tn) * 4                     # a_2 + folded bias
    scratch = tr * hidden * 2                          # bf16 normed scratch
    temps = 3 * tr * hidden * 4 + 2 * tr * tn * 4      # f32 LN / matmul temporaries
    return x_stream + o_stream + w_block + consts + scratch + temps


def _choose_tiles(rows, hidden, x_isz, o_isz, budget, buf1_ok, max_tile_rows):
    # tn candidates: full hidden first (C=1 -> W streamed from HBM only once),
    # then lane-aligned divisors of hidden, descending.
    tns = [hidden]
    if hidden % 128 == 0:
        tns += [t for t in range(hidden - 128, 127, -128) if hidden % t == 0]

    trs = []
    t = max(8, _round_up(min(max_tile_rows, rows), 8))
    while True:
        trs.append(t)
        if t <= 8:
            break
        t = max(8, _round_up(t // 2, 8))

    for tr in trs:                 # prefer tall row tiles (fewer W re-streams from HBM)
        for tn in tns:             # then the widest W column block that fits VMEM
            w_bufs = 1 if (tn == hidden and buf1_ok) else 2
            if _vmem_estimate(tr, tn, hidden, x_isz, o_isz, w_bufs) <= budget:
                return tr, tn
    return 8, tns[-1]              # last resort; Mosaic may spill


# ---------------------------------------------------------------------------
# Wrapper
# ---------------------------------------------------------------------------
def sublayer_connection(x, a2, b2, w, bias, *, max_tile_rows=512):
    """x: [batch, seq, hidden] -> x + Linear(LayerNorm(x)).

    x may be f32 or bf16 (bf16 halves HBM stream bytes in the mem-bound regime);
    LayerNorm statistics, matmul accumulation and the residual add are f32.
    """
    batch, seq, hidden = x.shape
    rows = batch * seq
    x_isz = jnp.dtype(x.dtype).itemsize

    # Per-generation VMEM budget (v5e/v6e: 128 MiB, v7x: 64 MiB per TensorCore).
    cap = _vmem_capacity_bytes()
    vmem_limit = int(min(cap, 112 * 1024 * 1024))
    tile_budget = max(vmem_limit - 8 * 1024 * 1024, vmem_limit // 2)

    buf1_ok = _buffered_one_supported()
    tr, tn = _choose_tiles(rows, hidden, x_isz, x_isz, tile_budget, buf1_ok,
                           max_tile_rows)
    num_col_tiles = hidden // tn
    padded_rows = _round_up(rows, tr)
    num_row_tiles = padded_rows // tr

    x2d = x.reshape(rows, hidden)
    if padded_rows != rows:
        # Zero-padded rows are harmless: diff==0 -> normed==0; rows sliced off below.
        x2d = jnp.pad(x2d, ((0, padded_rows - rows), (0, 0)))

    a2_2d = a2.reshape(1, hidden).astype(jnp.float32)
    w_f32 = w.astype(jnp.float32)
    # Fold b_2 through the weight: Linear(LN(x)) = (a2*(x-mean)*inv) @ W + (b2 @ W + bias)
    bias_eff = (b2.astype(jnp.float32) @ w_f32
                + bias.astype(jnp.float32)).reshape(1, hidden)
    w_bf16 = w_f32.astype(jnp.bfloat16)      # half the DMA bytes, native MXU dtype

    if num_col_tiles == 1 and buf1_ok:
        # W is grid-invariant -> single VMEM buffer (no pipelining needed).
        w_spec = pl.BlockSpec((hidden, tn), lambda i, j: (0, j),
                              pipeline_mode=pl.Buffered(1))
    else:
        # W column block changes with j -> keep default double-buffering.
        w_spec = pl.BlockSpec((hidden, tn), lambda i, j: (0, j))

    # TODO(synk): on 128 MiB parts in the HBM-bound regime (small hidden) a
    # pl.Buffered(3) x-input spec can hide DMA latency spikes at negligible cost.

    out2d = pl.pallas_call(
        sublayer_connection_kernel,
        out_shape=jax.ShapeDtypeStruct((padded_rows, hidden), x.dtype),
        grid_spec=pltpu.PrefetchScalarGridSpec(
            num_scalar_prefetch=0,
            grid=(num_row_tiles, num_col_tiles),
            in_specs=[
                pl.BlockSpec((tr, hidden), lambda i, j: (i, 0)),   # x row tile
                pl.BlockSpec((1, hidden), lambda i, j: (0, 0)),    # a_2
                w_spec,                                            # W column block (bf16)
                pl.BlockSpec((1, tn), lambda i, j: (0, j)),        # folded bias block
            ],
            out_specs=pl.BlockSpec((tr, tn), lambda i, j: (i, j)),
            scratch_shapes=[pltpu.VMEM((tr, hidden), jnp.bfloat16)],
        ),
        compiler_params=pltpu.CompilerParams(
            # Row axis is megacore-parallel; the N axis must stay sequential per
            # core so the j==0 scratch fill covers every column block it feeds.
            dimension_semantics=("parallel", "arbitrary"),
            vmem_limit_bytes=vmem_limit,
        ),
    )(x2d, a2_2d, w_bf16, bias_eff)

    if padded_rows != rows:
        out2d = out2d[:rows]
    return out2d.reshape(batch, seq, hidden)


# ---------------------------------------------------------------------------
# References
# ---------------------------------------------------------------------------
def _layernorm_ref(xf, a2, b2):
    n = xf.shape[-1]
    mean = jnp.mean(xf, axis=-1, keepdims=True)
    diff = xf - mean
    var = jnp.sum(diff * diff, axis=-1, keepdims=True) / (n - 1)   # unbiased std**2
    return a2 * diff / jnp.sqrt(var + EPS) + b2


def reference_f32(x, a2, b2, w, bias):
    """Pure-f32 mirror of the PyTorch forward (semantic reference)."""
    xf = x.astype(jnp.float32)
    y = _layernorm_ref(xf, a2, b2) @ w + bias
    return (xf + y).astype(x.dtype)


def reference_matched(x, a2, b2, w, bias):
    """Mirror of the kernel math: bf16 MXU operands, f32 acc, b_2 folded into bias."""
    xf = x.astype(jnp.float32)
    n = xf.shape[-1]
    mean = jnp.mean(xf, axis=-1, keepdims=True)
    diff = xf - mean
    var = jnp.sum(diff * diff, axis=-1, keepdims=True) / (n - 1)
    normed = diff * (jax.lax.rsqrt(var + EPS) * a2)
    bias_eff = b2 @ w + bias
    y = jnp.dot(normed.astype(jnp.bfloat16), w.astype(jnp.bfloat16),
                preferred_element_type=jnp.float32) + bias_eff
    return (xf + y).astype(x.dtype)


if __name__ == "__main__":
    hidden = 128
    key = jax.random.PRNGKey(0)
    kx, kw, kx2, kx3 = jax.random.split(key, 4)

    # LayerNorm params as in __init__: a_2 = ones, b_2 = zeros
    a2 = jnp.ones((hidden,), dtype=jnp.float32)
    b2 = jnp.zeros((hidden,), dtype=jnp.float32)

    # Deterministic synthetic sublayer (Linear hidden -> hidden)
    w = jax.random.normal(kw, (hidden, hidden), dtype=jnp.float32) * 0.02
    bias = jnp.zeros((hidden,), dtype=jnp.float32)

    # Case 1: small, tile-aligned input
    x = jax.random.normal(kx, (2, 8, hidden), dtype=jnp.float32)
    out = jax.block_until_ready(sublayer_connection(x, a2, b2, w, bias))
    assert out.shape == x.shape
    assert jnp.allclose(out, reference_matched(x, a2, b2, w, bias),
                        atol=2e-4, rtol=2e-4)
    assert jnp.allclose(out, reference_f32(x, a2, b2, w, bias),
                        atol=5e-2, rtol=5e-2)

    # Case 2: ragged rows + non-trivial LayerNorm affine (padding + folded b_2 path)
    a2b = 1.0 + 0.1 * jax.random.normal(jax.random.PRNGKey(7), (hidden,), jnp.float32)
    b2b = 0.1 * jax.random.normal(jax.random.PRNGKey(8), (hidden,), jnp.float32)
    biasb = 0.05 * jax.random.normal(jax.random.PRNGKey(9), (hidden,), jnp.float32)
    x2 = jax.random.normal(kx2, (3, 5, hidden), dtype=jnp.float32)
    out2 = jax.block_until_ready(sublayer_connection(x2, a2b, b2b, w, biasb))
    assert out2.shape == x2.shape
    assert jnp.allclose(out2, reference_matched(x2, a2b, b2b, w, biasb),
                        atol=5e-4, rtol=5e-4)

    # Case 3: bf16 activations (halved HBM stream bytes); stats stay f32 in-kernel
    x3 = jax.random.normal(kx3, (2, 16, hidden), jnp.float32).astype(jnp.bfloat16)
    out3 = jax.block_until_ready(sublayer_connection(x3, a2, b2, w, bias))
    assert out3.dtype == jnp.bfloat16
    assert jnp.allclose(out3.astype(jnp.float32),
                        reference_matched(x3, a2, b2, w, bias).astype(jnp.float32),
                        atol=2e-2, rtol=2e-2)

    print("KERNEL_OK")
</pallas_src>

<mosaic_0001>
module attributes {stable_mosaic.version = 11 : i64} {
  func.func @probe_kernel(%arg0: i32, %arg1: memref<8x128xf32, #tpu.memory_space<vmem>>, %arg2: memref<8x128xf32, #tpu.memory_space<vmem>>, %arg3: memref<8x128xf32, #tpu.memory_space<vmem>>) attributes {dimension_semantics = [#tpu.dimension_semantics<arbitrary>], iteration_bounds = array<i64: 1>, scalar_prefetch = 0 : i64, scratch_operands = 0 : i64, tpu.core_type = #tpu.core_type<tc>, window_params = [{pipeline_mode = #tpu.pipeline_mode<synchronous>, transform_indices = @transform_0, window_bounds = array<i64: 8, 128>}, {transform_indices = @transform_1, window_bounds = array<i64: 8, 128>}, {transform_indices = @transform_2, window_bounds = array<i64: 8, 128>}]} {
    %c0 = arith.constant 0 : index
    %c0_0 = arith.constant 0 : index
    %0 = vector.load %arg2[%c0, %c0_0] : memref<8x128xf32, #tpu.memory_space<vmem>>, vector<8x128xf32>
    %c0_1 = arith.constant 0 : index
    %c0_2 = arith.constant 0 : index
    %1 = vector.load %arg1[%c0_1, %c0_2] : memref<8x128xf32, #tpu.memory_space<vmem>>, vector<8x128xf32>
    %2 = arith.addf %0, %1 : vector<8x128xf32>
    %c0_3 = arith.constant 0 : index
    %c0_4 = arith.constant 0 : index
    %3 = vector.load %arg3[%c0_3, %c0_4] : memref<8x128xf32, #tpu.memory_space<vmem>>, vector<8x128xf32>
    tpu.vector_store %arg3[%c0_3, %c0_4], %2 {strides = array<i32>} : memref<8x128xf32, #tpu.memory_space<vmem>>, vector<8x128xf32>,
    return
  }
  func.func @transform_0(%arg0: i32) -> (i32, i32) {
    %c0_i32 = arith.constant 0 : i32
    %c0_i32_0 = arith.constant 0 : i32
    %c0_i32_1 = arith.constant 0 : i32
    return %c0_i32, %c0_i32_0 : i32, i32
  }
  func.func @transform_1(%arg0: i32) -> (i32, i32) {
    %c0_i32 = arith.constant 0 : i32
    %c0_i32_0 = arith.constant 0 : i32
    return %arg0, %c0_i32 : i32, i32
  }
  func.func @transform_2(%arg0: i32) -> (i32, i32) {
    %c0_i32 = arith.constant 0 : i32
    %c0_i32_0 = arith.constant 0 : i32
    return %arg0, %c0_i32 : i32, i32
  }
}

module attributes {stable_mosaic.version = 11 : i64} {
  func.func @sublayer_connection_kernel(%arg0: i32, %arg1: i32, %arg2: memref<16x128xf32, #tpu.memory_space<vmem>>, %arg3: memref<1x128xf32, #tpu.memory_space<vmem>>, %arg4: memref<128x128xbf16, #tpu.memory_space<vmem>>, %arg5: memref<1x128xf32, #tpu.memory_space<vmem>>, %arg6: memref<16x128xf32, #tpu.memory_space<vmem>>, %arg7: memref<16x128xbf16, #tpu.memory_space<vmem>>) attributes {dimension_semantics = [#tpu.dimension_semantics<parallel>, #tpu.dimension_semantics<arbitrary>], iteration_bounds = array<i64: 1, 1>, scalar_prefetch = 0 : i64, scratch_operands = 1 : i64, tpu.core_type = #tpu.core_type<tc>, window_params = [{transform_indices = @transform_0, window_bounds = array<i64: 16, 128>}, {pipeline_mode = #tpu.pipeline_mode<synchronous>, transform_indices = @transform_1, window_bounds = array<i64: 1, 128>}, {transform_indices = @transform_2, window_bounds = array<i64: 128, 128>}, {transform_indices = @transform_3, window_bounds = array<i64: 1, 128>}, {transform_indices = @transform_4, window_bounds = array<i64: 16, 128>}]} {
    %c0_i32 = arith.constant 0 : i32
    %0 = arith.cmpi eq, %arg1, %c0_i32 : i32
    %1 = arith.extui %0 : i1 to i32
    %c0_i32_0 = arith.constant 0 : i32
    %2 = arith.cmpi ne, %1, %c0_i32_0 : i32
    scf.if %2 {
      %c0_10 = arith.constant 0 : index
      %c0_11 = arith.constant 0 : index
      %12 = vector.load %arg2[%c0_10, %c0_11] : memref<16x128xf32, #tpu.memory_space<vmem>>, vector<16x128xf32>
      %cst_12 = arith.constant dense<0.000000e+00> : vector<16xf32>
      %13 = vector.multi_reduction <add>, %12, %cst_12 [1] : vector<16x128xf32> to vector<16xf32>
      %14 = vector.shape_cast %13 : vector<16xf32> to vector<16x1xf32>
      %cst_13 = arith.constant 1.280000e+02 : f32
      %15 = vector.broadcast %cst_13 : f32 to vector<16x1xf32>
      %16 = arith.divf %14, %15 : vector<16x1xf32>
      %17 = vector.broadcast %16 : vector<16x1xf32> to vector<16x128xf32>
      %18 = arith.subf %12, %17 : vector<16x128xf32>
      %19 = arith.mulf %18, %18 : vector<16x128xf32>
      %cst_14 = arith.constant dense<0.000000e+00> : vector<16xf32>
      %20 = vector.multi_reduction <add>, %19, %cst_14 [1] : vector<16x128xf32> to vector<16xf32>
      %21 = vector.shape_cast %20 : vector<16xf32> to vector<16x1xf32>
      %cst_15 = arith.constant 0.00787401571 : f32
      %22 = vector.broadcast %cst_15 : f32 to vector<16x1xf32>
      %23 = arith.mulf %21, %22 : vector<16x1xf32>
      %cst_16 = arith.constant 9.99999997E-7 : f32
      %24 = vector.broadcast %cst_16 : f32 to vector<16x1xf32>
      %25 = arith.addf %23, %24 : vector<16x1xf32>
      %26 = math.rsqrt %25 : vector<16x1xf32>
      %c0_17 = arith.constant 0 : index
      %c0_18 = arith.constant 0 : index
      %27 = vector.load %arg3[%c0_17, %c0_18] : memref<1x128xf32, #tpu.memory_space<vmem>>, vector<1x128xf32>
      %28 = vector.broadcast %26 : vector<16x1xf32> to vector<16x128xf32>
      %29 = vector.broadcast %27 : vector<1x128xf32> to vector<16x128xf32>
      %30 = arith.mulf %28, %29 : vector<16x128xf32>
      %31 = arith.mulf %18, %30 : vector<16x128xf32>
      %32 = arith.truncf %31 : vector<16x128xf32> to vector<16x128xbf16>
      %c0_19 = arith.constant 0 : index
      %c0_20 = arith.constant 0 : index
      %33 = vector.load %arg7[%c0_19, %c0_20] : memref<16x128xbf16, #tpu.memory_space<vmem>>, vector<16x128xbf16>
      tpu.vector_store %arg7[%c0_19, %c0_20], %32 {strides = array<i32>} : memref<16x128xbf16, #tpu.memory_space<vmem>>, vector<16x128xbf16>,
    } else {
    }
    %c0 = arith.constant 0 : index
    %c0_1 = arith.constant 0 : index
    %3 = vector.load %arg7[%c0, %c0_1] : memref<16x128xbf16, #tpu.memory_space<vmem>>, vector<16x128xbf16>
    %c0_2 = arith.constant 0 : index
    %c0_3 = arith.constant 0 : index
    %4 = vector.load %arg4[%c0_2, %c0_3] : memref<128x128xbf16, #tpu.memory_space<vmem>>, vector<128x128xbf16>
    %cst = arith.constant dense<0.000000e+00> : vector<16x128xf32>
    %5 = tpu.matmul %3, %4, %cst {dimension_numbers = #tpu.dot_dimension_numbers<[1], [0], [0], [1], [0, 0, 1, 1], [], []>} : vector<16x128xbf16>, vector<128x128xbf16>, vector<16x128xf32> -> vector<16x128xf32>
    %c0_4 = arith.constant 0 : index
    %c0_5 = arith.constant 0 : index
    %6 = vector.load %arg5[%c0_4, %c0_5] : memref<1x128xf32, #tpu.memory_space<vmem>>, vector<1x128xf32>
    %7 = vector.broadcast %6 : vector<1x128xf32> to vector<16x128xf32>
    %8 = arith.addf %5, %7 : vector<16x128xf32>
    %c0_6 = arith.constant 0 : index
    %c0_7 = arith.constant 0 : index
    %9 = vector.load %arg2[%c0_6, %c0_7] : memref<16x128xf32, #tpu.memory_space<vmem>>, vector<16x128xf32>
    %10 = arith.addf %9, %8 : vector<16x128xf32>
    %c0_8 = arith.constant 0 : index
    %c0_9 = arith.constant 0 : index
    %11 = vector.load %arg6[%c0_8, %c0_9] : memref<16x128xf32, #tpu.memory_space<vmem>>, vector<16x128xf32>
    tpu.vector_store %arg6[%c0_8, %c0_9], %10 {strides = array<i32>} : memref<16x128xf32, #tpu.memory_space<vmem>>, vector<16x128xf32>,
    return
  }
  func.func @transform_0(%arg0: i32, %arg1: i32) -> (i32, i32) {
    %c0_i32 = arith.constant 0 : i32
    %c0_i32_0 = arith.constant 0 : i32
    return %arg0, %c0_i32 : i32, i32
  }
  func.func @transform_1(%arg0: i32, %arg1: i32) -> (i32, i32) {
    %c0_i32 = arith.constant 0 : i32
    %c0_i32_0 = arith.constant 0 : i32
    %c0_i32_1 = arith.constant 0 : i32
    return %c0_i32, %c0_i32_0 : i32, i32
  }
  func.func @transform_2(%arg0: i32, %arg1: i32) -> (i32, i32) {
    %c0_i32 = arith.constant 0 : i32
    %c0_i32_0 = arith.constant 0 : i32
    return %c0_i32, %arg1 : i32, i32
  }
  func.func @transform_3(%arg0: i32, %arg1: i32) -> (i32, i32) {
    %c0_i32 = arith.constant 0 : i32
    %c0_i32_0 = arith.constant 0 : i32
    return %c0_i32, %arg1 : i32, i32
  }
  func.func @transform_4(%arg0: i32, %arg1: i32) -> (i32, i32) {
    %c0_i32 = arith.constant 0 : i32
    return %arg0, %arg1 : i32, i32
  }
}

</mosaic_0001>

<llo_original>
// kernel: tpu_custom_call.1
$region0: #{tpu_custom_call.1}
  #allocation0 [shape = 'u32[]', space=smem, size = 0x4, offset = 0x4, fixed_abs, tag = 'smem constant byte address 0x4 - core index']
  #allocation1 [shape = 'u32[144,128]{1,0:T(1,128)}', space=vmem, size = 0x12000, scoped, tag = 'internal scratch']
  %s0 = inlined_call_operand.hbm [shape: f32[8,128], index: 0, kind: input, shape index: {}]
  %s1 = inlined_call_operand.hbm [shape: f32[8,128], index: 1, kind: input, shape index: {}]
  %s2 = inlined_call_operand.hbm [shape: f32[8,128], index: 2, kind: output, shape index: {}]
  %s3 = sld [smem:[#allocation0]]
  $region26: #{tpu_custom_call.1} parent=0
    _
  %s5 = ssub.s32 1, %s3
  %s6 = scalar_select 0, %s5, %s3
  $region1: #{tpu_custom_call.1} parent=0
    #allocation2 [shape = 'u8[4096]{0}', space=vmem, size = 0x1000, scoped, tag = 'input window, operand 0, single buffered']
    #allocation3 [shape = 's32[1]{0}', space=sflag, size = 0x4, scoped, tag = 'scoped memory for tpu_custom_call.1']
    #allocation4 [shape = 's32[1]{0}', space=sflag, size = 0x4, scoped, tag = 'scoped memory for tpu_custom_call.1']
    #allocation5 [shape = 'u8[4096]{0}', space=vmem, size = 0x1000, scoped, tag = 'input window, operand 1, single buffered']
    #allocation6 [shape = 's32[1]{0}', space=sflag, size = 0x4, scoped, tag = 'scoped memory for tpu_custom_call.1']
    #allocation7 [shape = 'u8[4096]{0}', space=vmem, size = 0x1000, scoped, tag = 'output window, operand 0, single buffered']
    %7 = vsyncpa [#allocation3], 0
    %8 = vsyncpa [#allocation6], 0
    %9 = vsyncpa [#allocation4], 0
    // Predicated region
    $region2: #{tpu_custom_call.1} parent=1 // pred_check
      _
    $region3: #{tpu_custom_call.1} parent=1 // pred_check_branch
      %11 = sbr.rel (0) target = $region5
    $region4: #{tpu_custom_call.1} parent=1 // pred_region
      %s13 = ssub.s32 128, 128
      %14 = vsyncadd [#allocation3], %s13
      %s16 = sshll.u32 [#allocation2], 4
      %s17 = int_to_ptr.vmem [resolvable:$true] %s16
      %19 = dma.hbm_to_vmem [thread:$0]  %s0, 128, %s17, [#allocation3]
    $region5: #{tpu_custom_call.1} parent=1 // pred_fallthru
      _
    // Predicated region
    $region6: #{tpu_custom_call.1} parent=1 // pred_check
      _
    $region7: #{tpu_custom_call.1} parent=1 // pred_check_branch
      %21 = sbr.rel (0) target = $region9
    $region8: #{tpu_custom_call.1} parent=1 // pred_region
      %s23 = ssub.s32 128, 128
      %24 = vsyncadd [#allocation6], %s23
      %s26 = sshll.u32 [#allocation5], 4
      %s27 = int_to_ptr.vmem [resolvable:$true] %s26
      %29 = dma.hbm_to_vmem [thread:$0]  %s1, 128, %s27, [#allocation6]
    $region9: #{tpu_custom_call.1} parent=1 // pred_fallthru
      _
    // Predicated region
    $region10: #{tpu_custom_call.1} parent=1 // pred_check
      _
    $region11: #{tpu_custom_call.1} parent=1 // pred_check_branch
      %31 = sbr.rel (0) target = $region13
    $region12: #{tpu_custom_call.1} parent=1 // pred_region
      %32 = dma.done [#allocation3], 128
    $region13: #{tpu_custom_call.1} parent=1 // pred_fallthru
      _
    // Predicated region
    $region14: #{tpu_custom_call.1} parent=1 // pred_check
      _
    $region15: #{tpu_custom_call.1} parent=1 // pred_check_branch
      %34 = sbr.rel (0) target = $region17
    $region16: #{tpu_custom_call.1} parent=1 // pred_region
      %35 = dma.done [#allocation6], 128
    $region17: #{tpu_custom_call.1} parent=1 // pred_fallthru
      _
    %v36 = vld [vmem:[#allocation5] sm:$0xff]
    %v37 = vld [vmem:[#allocation2] sm:$0xff]
    %v38 = vadd.f32 %v36, %v37
    %39 = vst [vmem:[#allocation7] sm:$0xff] %v38
    // Predicated region
    $region18: #{tpu_custom_call.1} parent=1 // pred_check
      _
    $region19: #{tpu_custom_call.1} parent=1 // pred_check_branch
      %41 = sbr.rel (0) target = $region21
    $region20: #{tpu_custom_call.1} parent=1 // pred_region
      %s43 = ssub.s32 128, 128
      %44 = vsyncadd [#allocation4], %s43
      %s46 = sshll.u32 [#allocation7], 4
      %s47 = int_to_ptr.vmem [resolvable:$true] %s46
      %49 = dma.vmem_to_hbm [thread:$0]  %s47, 128, %s2, [#allocation4]
    $region21: #{tpu_custom_call.1} parent=1 // pred_fallthru
      _
    // Predicated region
    $region22: #{tpu_custom_call.1} parent=1 // pred_check
      _
    $region23: #{tpu_custom_call.1} parent=1 // pred_check_branch
      %51 = sbr.rel (0) target = $region25
    $region24: #{tpu_custom_call.1} parent=1 // pred_region
      %52 = dma.done [#allocation4], 128
    $region25: #{tpu_custom_call.1} parent=1 // pred_fallthru
      _
    %53 = vsyncpa [#allocation3], 1
    %54 = vsyncpa [#allocation6], 1
    %55 = vsyncpa [#allocation4], 1

// kernel: tpu_custom_call.1
$region0: #{tpu_custom_call.1}
  #allocation0 [shape = 'u32[]', space=smem, size = 0x4, offset = 0x4, fixed_abs, tag = 'smem constant byte address 0x4 - core index']
  #allocation1 [shape = 'u32[144,128]{1,0:T(1,128)}', space=vmem, size = 0x12000, scoped, tag = 'internal scratch']
  #allocation2 [shape = 'bf16[16,128]{1,0:T(16,128)(2,1)}', space=vmem, size = 0x1000, scoped, tag = 'scratch operand']
  %s0 = inlined_call_operand.hbm [shape: f32[16,128], index: 0, kind: input, shape index: {}]
  %s1 = inlined_call_operand.hbm [shape: f32[1,128], index: 1, kind: input, shape index: {}]
  %s2 = inlined_call_operand.hbm [shape: bf16[128,128], index: 2, kind: input, shape index: {}]
  %s3 = inlined_call_operand.hbm [shape: f32[1,128], index: 3, kind: input, shape index: {}]
  %s4 = inlined_call_operand.hbm [shape: f32[16,128], index: 4, kind: output, shape index: {}]
  %s5 = sld [smem:[#allocation0]]
  $region46: #{tpu_custom_call.1} parent=0
    _
  %s7 = ssub.s32 1, %s5
  %s8 = scalar_select 0, %s7, %s5
  $region1: #{tpu_custom_call.1} parent=0
    #allocation3 [shape = 'u8[8192]{0}', space=vmem, size = 0x2000, scoped, tag = 'input window, operand 0, single buffered']
    #allocation4 [shape = 's32[1]{0}', space=sflag, size = 0x4, scoped, tag = 'scoped memory for tpu_custom_call.1']
    #allocation5 [shape = 's32[1]{0}', space=sflag, size = 0x4, scoped, tag = 'scoped memory for tpu_custom_call.1']
    #allocation6 [shape = 'u8[512]{0}', space=vmem, size = 0x400, scoped, tag = 'input window, operand 1, single buffered']
    #allocation7 [shape = 's32[1]{0}', space=sflag, size = 0x4, scoped, tag = 'scoped memory for tpu_custom_call.1']
    #allocation8 [shape = 'u8[32768]{0}', space=vmem, size = 0x8000, scoped, tag = 'input window, operand 2, single buffered']
    #allocation9 [shape = 'u8[512]{0}', space=vmem, size = 0x400, scoped, tag = 'input window, operand 3, single buffered']
    #allocation10 [shape = 's32[1]{0}', space=sflag, size = 0x4, scoped, tag = 'scoped memory for tpu_custom_call.1']
    #allocation11 [shape = 'u8[8192]{0}', space=vmem, size = 0x2000, scoped, tag = 'output window, operand 0, single buffered']
    %9 = vsyncpa [#allocation4], 0
    %10 = vsyncpa [#allocation7], 0
    %11 = vsyncpa [#allocation10], 0
    %12 = vsyncpa [#allocation5], 0
    // Predicated region
    $region2: #{tpu_custom_call.1} parent=1 // pred_check
      _
    $region3: #{tpu_custom_call.1} parent=1 // pred_check_branch
      %14 = sbr.rel (0) target = $region5
    $region4: #{tpu_custom_call.1} parent=1 // pred_region
      %s16 = ssub.s32 256, 256
      %17 = vsyncadd [#allocation4], %s16
      %s18 = sshll.u32 [#allocation3], 4
      %s19 = int_to_ptr.vmem [resolvable:$true] %s18
      %24 = dma.hbm_to_vmem [thread:$0]  %s0, 256, %s19, [#allocation4], 128, 128, 8
    $region5: #{tpu_custom_call.1} parent=1 // pred_fallthru
      _
    // Predicated region
    $region6: #{tpu_custom_call.1} parent=1 // pred_check
      _
    $region7: #{tpu_custom_call.1} parent=1 // pred_check_branch
      %26 = sbr.rel (0) target = $region9
    $region8: #{tpu_custom_call.1} parent=1 // pred_region
      %s28 = ssub.s32 16, 16
      %29 = vsyncadd [#allocation7], %s28
      %s31 = sshll.u32 [#allocation6], 4
      %s32 = int_to_ptr.vmem [resolvable:$true] %s31
      %34 = dma.hbm_to_vmem [thread:$0]  %s1, 16, %s32, [#allocation7]
    $region9: #{tpu_custom_call.1} parent=1 // pred_fallthru
      _
    // Predicated region
    $region10: #{tpu_custom_call.1} parent=1 // pred_check
      _
    $region11: #{tpu_custom_call.1} parent=1 // pred_check_branch
      %36 = sbr.rel (0) target = $region13
    $region12: #{tpu_custom_call.1} parent=1 // pred_region
      %s38 = ssub.s32 1024, 1024
      %39 = vsyncadd [#allocation7], %s38
      %s40 = sshll.u32 [#allocation8], 4
      %s41 = int_to_ptr.vmem [resolvable:$true] %s40
      %46 = dma.hbm_to_vmem [thread:$0]  %s2, 1024, %s41, [#allocation7], 64, 64, 4
    $region13: #{tpu_custom_call.1} parent=1 // pred_fallthru
      _
    // Predicated region
    $region14: #{tpu_custom_call.1} parent=1 // pred_check
      _
    $region15: #{tpu_custom_call.1} parent=1 // pred_check_branch
      %48 = sbr.rel (0) target = $region17
    $region16: #{tpu_custom_call.1} parent=1 // pred_region
      %s50 = ssub.s32 16, 16
      %51 = vsyncadd [#allocation10], %s50
      %s53 = sshll.u32 [#allocation9], 4
      %s54 = int_to_ptr.vmem [resolvable:$true] %s53
      %56 = dma.hbm_to_vmem [thread:$0]  %s3, 16, %s54, [#allocation10]
    $region17: #{tpu_custom_call.1} parent=1 // pred_fallthru
      _
    // Predicated region
    $region18: #{tpu_custom_call.1} parent=1 // pred_check
      _
    $region19: #{tpu_custom_call.1} parent=1 // pred_check_branch
      %58 = sbr.rel (0) target = $region21
    $region20: #{tpu_custom_call.1} parent=1 // pred_region
      %59 = dma.done [#allocation4], 256
    $region21: #{tpu_custom_call.1} parent=1 // pred_fallthru
      _
    // Predicated region
    $region22: #{tpu_custom_call.1} parent=1 // pred_check
      _
    $region23: #{tpu_custom_call.1} parent=1 // pred_check_branch
      %61 = sbr.rel (0) target = $region25
    $region24: #{tpu_custom_call.1} parent=1 // pred_region
      %62 = dma.done [#allocation7], 16
    $region25: #{tpu_custom_call.1} parent=1 // pred_fallthru
      _
    // Predicated region
    $region26: #{tpu_custom_call.1} parent=1 // pred_check
      _
    $region27: #{tpu_custom_call.1} parent=1 // pred_check_branch
      %64 = sbr.rel (0) target = $region29
    $region28: #{tpu_custom_call.1} parent=1 // pred_region
      %65 = dma.done [#allocation7], 1024
    $region29: #{tpu_custom_call.1} parent=1 // pred_fallthru
      _
    // Predicated region
    $region30: #{tpu_custom_call.1} parent=1 // pred_check
      _
    $region31: #{tpu_custom_call.1} parent=1 // pred_check_branch
      %67 = sbr.rel (0) target = $region33
    $region32: #{tpu_custom_call.1} parent=1 // pred_region
      %68 = dma.done [#allocation10], 16
    $region33: #{tpu_custom_call.1} parent=1 // pred_fallthru
      _
    %p70 = scmp.eq.s32.totalorder 0, 0
    // Predicated region
    $region34: #{tpu_custom_call.1} parent=1 // pred_check
      %p71 = pneg %p70
    $region35: #{tpu_custom_call.1} parent=1 // pred_check_branch
      %73 = sbr.rel (%p71) target = $region37
    $region36: #{tpu_custom_call.1} parent=1 // pred_region
      %v74 = vld [vmem:[#allocation3] sm:$0xff]
      %v75 = vld [vmem:[#allocation3 + $0x8] sm:$0xff]
      %76 = vadd.xlane.f32.xlu0 %v74
      %v77 = vpop.xlane.xlu0 %76
      %78 = vadd.xlane.f32.xlu0 %v75
      %v79 = vpop.xlane.xlu0 %78
      %v80 = vrcp.pop 128.0
      %v81 = vmul.f32 %v77, %v80
      %v82 = vmul.f32 %v79, %v80
      %v83 = vsub.f32 %v74, %v81
      %v84 = vsub.f32 %v75, %v82
      %v85 = vmul.f32 %v83, %v83
      %v86 = vmul.f32 %v84, %v84
      %87 = vadd.xlane.f32.xlu0 %v85
      %v88 = vpop.xlane.xlu0 %87
      %89 = vadd.xlane.f32.xlu0 %v86
      %v90 = vpop.xlane.xlu0 %89
      %v91 = vmul.f32 %v88, 0.007874016
      %v92 = vmul.f32 %v90, 0.007874016
      %v93 = vadd.f32 %v91, 1e-06
      %v94 = vadd.f32 %v92, 1e-06
      %v95 = vrsqrt.pop %v93
      %v96 = vrsqrt.pop %v94
      %v97 = vld [vmem:[#allocation6] sm:$0x1]
      %v99 = vlaneseq
      %v100 = vshrl.u32 %v99, 7
      %v101 = vsub.s32 0, %v100
      %v102 = vrot.slane %v97, %v101
      %v104 = vmul.f32 %v95, %v102
      %v105 = vmul.f32 %v96, %v102
      %v106 = vmul.f32 %v83, %v104
      %v107 = vmul.f32 %v84, %v105
      %v108 = vpack.c.bf16 %v107, %v106
      %109 = vst [vmem:[#allocation2] sm:$0xff] %v108
    $region37: #{tpu_custom_call.1} parent=1 // pred_fallthru
      _
    %v110 = vld [vmem:[#allocation2] sm:$0xff]
    %v111 = vld [vmem:[#allocation8] sm:$0xf]
    %v112 = vld [vmem:[#allocation8 + $0x4] sm:$0xf]
    %v113 = vld [vmem:[#allocation8 + $0x8] sm:$0xf]
    %v114 = vld [vmem:[#allocation8 + $0xc] sm:$0xf]
    %v115 = vld [vmem:[#allocation8 + $0x10] sm:$0xf]
    %v116 = vld [vmem:[#allocation8 + $0x14] sm:$0xf]
    %v117 = vld [vmem:[#allocation8 + $0x18] sm:$0xf]
    %v118 = vld [vmem:[#allocation8 + $0x1c] sm:$0xf]
    %v119 = vld [vmem:[#allocation8 + $0x20] sm:$0xf]
    %v120 = vld [vmem:[#allocation8 + $0x24] sm:$0xf]
    %v121 = vld [vmem:[#allocation8 + $0x28] sm:$0xf]
    %v122 = vld [vmem:[#allocation8 + $0x2c] sm:$0xf]
    %v123 = vld [vmem:[#allocation8 + $0x30] sm:$0xf]
    %v124 = vld [vmem:[#allocation8 + $0x34] sm:$0xf]
    %v125 = vld [vmem:[#allocation8 + $0x38] sm:$0xf]
    %v126 = vld [vmem:[#allocation8 + $0x3c] sm:$0xf]
    %v127 = vld [vmem:[#allocation9] sm:$0x1]
    %v129 = vlaneseq
    %v130 = vshrl.u32 %v129, 7
    %v131 = vsub.s32 0, %v130
    %v132 = vrot.slane %v127, %v131
    %v150 = vunpack.c.l.b16 %v111
    %v151 = vunpack.c.l.b16 %v112
    %v152 = vunpack.c.l.b16 %v113
    %v153 = vunpack.c.l.b16 %v114
    %v154 = vunpack.c.l.b16 %v115
    %v155 = vunpack.c.l.b16 %v116
    %v156 = vunpack.c.l.b16 %v117
    %v157 = vunpack.c.l.b16 %v118
    %v158 = vunpack.c.l.b16 %v119
    %v159 = vunpack.c.l.b16 %v120
    %v160 = vunpack.c.l.b16 %v121
    %v161 = vunpack.c.l.b16 %v122
    %v162 = vunpack.c.l.b16 %v123
    %v163 = vunpack.c.l.b16 %v124
    %v164 = vunpack.c.l.b16 %v125
    %v165 = vunpack.c.l.b16 %v126
    %v166 = vpack.c.b16 %v151, %v150
    %v167 = vpack.c.b16 %v153, %v152
    %v168 = vpack.c.b16 %v155, %v154
    %v169 = vpack.c.b16 %v157, %v156
    %v170 = vpack.c.b16 %v159, %v158
    %v171 = vpack.c.b16 %v161, %v160
    %v172 = vpack.c.b16 %v163, %v162
    %v173 = vpack.c.b16 %v165, %v164
    %182 = vmatprep.subr.bf16.mxu0 0
    %183 = vmatpush1.bf16.msra.mxu0 %v166
    %184 = vmatprep.subr.bf16.mxu0 0
    %185 = vmatpush1.bf16.msra.mxu0 %v167
    %186 = vmatprep.subr.bf16.mxu0 0
    %187 = vmatpush1.bf16.msra.mxu0 %v168
    %188 = vmatprep.subr.bf16.mxu0 0
    %189 = vmatpush1.bf16.msra.mxu0 %v169
    %190 = vmatprep.subr.bf16.mxu0 0
    %191 = vmatpush1.bf16.msra.mxu0 %v170
    %192 = vmatprep.subr.bf16.mxu0 0
    %193 = vmatpush1.bf16.msra.mxu0 %v171
    %194 = vmatprep.subr.bf16.mxu0 0
    %195 = vmatpush1.bf16.msra.mxu0 %v172
    %196 = vmatprep.subr.bf16.mxu0 0
    %197 = vmatpush1.bf16.msra.mxu0 %v173
    %198 = vmatprep.subr.bf16.mxu0 0
    %199 = vmatpush1.bf16.msra.mxu0 0
    %200 = vmatprep.subr.bf16.mxu0 0
    %201 = vmatpush1.bf16.msra.mxu0 0
    %202 = vmatprep.subr.bf16.mxu0 0
    %203 = vmatpush1.bf16.msra.mxu0 0
    %204 = vmatprep.subr.bf16.mxu0 0
    %205 = vmatpush1.bf16.msra.mxu0 0
    %206 = vmatprep.subr.bf16.mxu0 0
    %207 = vmatpush1.bf16.msra.mxu0 0
    %208 = vmatprep.subr.bf16.mxu0 0
    %209 = vmatpush1.bf16.msra.mxu0 0
    %210 = vmatprep.subr.bf16.mxu0 0
    %211 = vmatpush1.bf16.msra.mxu0 0
    %212 = vmatprep.subr.bf16.mxu0 0
    %213 = vmatpush1.bf16.msra.mxu0 0
    %214 = vmatprep.mubr.bf16.mxu0 0
    %215 = vmatmul.mubr.bf16.gmra.mrb[0].mxu0 %v110
    %v216 = vpop.f32.mrb[0].mxu0
    %v217 = vadd.f32 %v132, %v216
    %v218 = vpop.f32.mrb[0].mxu0
    %v219 = vpop.f32.mrb[0].mxu0
    %v220 = vadd.f32 %v132, %v219
    %v221 = vpop.f32.mrb[0].mxu0
    %222 = vdwg.mxu0
    %v223 = vld [vmem:[#allocation3] sm:$0xff]
    %v224 = vld [vmem:[#allocation3 + $0x8] sm:$0xff]
    %v225 = vadd.f32 %v223, %v217
    %v226 = vadd.f32 %v224, %v220
    %227 = vst [vmem:[#allocation11] sm:$0xff] %v225
    %228 = vst [vmem:[#allocation11 + $0x8] sm:$0xff] %v226
    // Predicated region
    $region38: #{tpu_custom_call.1} parent=1 // pred_check
      _
    $region39: #{tpu_custom_call.1} parent=1 // pred_check_branch
      %230 = sbr.rel (0) target = $region41
    $region40: #{tpu_custom_call.1} parent=1 // pred_region
      %s232 = ssub.s32 256, 256
      %233 = vsyncadd [#allocation5], %s232
      %s234 = sshll.u32 [#allocation11], 4
      %s235 = int_to_ptr.vmem [resolvable:$true] %s234
      %240 = dma.vmem_to_hbm [thread:$0]  %s235, 256, %s4, [#allocation5], 128, 128, 8
    $region41: #{tpu_custom_call.1} parent=1 // pred_fallthru
      _
    // Predicated region
    $region42: #{tpu_custom_call.1} parent=1 // pred_check
      _
    $region43: #{tpu_custom_call.1} parent=1 // pred_check_branch
      %242 = sbr.rel (0) target = $region45
    $region44: #{tpu_custom_call.1} parent=1 // pred_region
      %243 = dma.done [#allocation5], 256
    $region45: #{tpu_custom_call.1} parent=1 // pred_fallthru
      _
    %244 = vsyncpa [#allocation4], 1
    %245 = vsyncpa [#allocation7], 1
    %246 = vsyncpa [#allocation10], 1
    %247 = vsyncpa [#allocation5], 1

</llo_original>
